<compile_context>
chip_gen: v5e
topology: v5e:2x2
jax: 0.10.0
libtpu: 0.0.40
codegen_flags: <defaults>
</compile_context>

<pallas_src>
import math

import jax
import jax.numpy as jnp
from jax.experimental import pallas as pl
from jax.experimental.pallas import tpu as pltpu


def _make_fused_kernel(k, s, p, d, H, W, Ho, Wo, base):
    """Fused max-pool (H then W) + LNS log conversion on a (Bb, H, W) block."""
    Hp, Wp = H + 2 * p, W + 2 * p
    inv_ln_base = 1.0 / math.log(base)

    def win(t, n_out):
        # sublane window for pooling tap t: rows t*d, t*d+s, ..., t*d+(n_out-1)*s
        start = t * d
        if s == 1:
            return pl.ds(start, n_out)
        return pl.ds(start, n_out, s)

    def kernel(x_ref, of_ref, ol_ref, *scratch):
        if p > 0:
            xp_ref, ws_ref = scratch
            # -inf padding in the H direction only, built entirely in VMEM
            # (max_pool2d pads with -inf).  W padding is folded into ws_ref.
            xp_ref[...] = jnp.full((xp_ref.shape[0], Hp, W), -jnp.inf,
                                   dtype=xp_ref.dtype)
            xp_ref[:, p:p + H, :] = x_ref[...]
            src = xp_ref
        else:
            (ws_ref,) = scratch
            src = x_ref

        # ---- pass 1: max over the H window taps (sublane-strided reads) ----
        acc = src[:, win(0, Ho), :]
        for t in range(1, k):
            acc = jnp.maximum(acc, src[:, win(t, Ho), :])       # (Bb, Ho, W)

        # in-register transpose of the two minor dims (XLU), W -> sublane.
        # The W-direction -inf padding is applied here via the scratch pre-fill
        # instead of a second padded copy of the input.
        if p > 0:
            ws_ref[...] = jnp.full(ws_ref.shape, -jnp.inf, dtype=ws_ref.dtype)
            ws_ref[:, p:p + W, :] = jnp.transpose(acc, (0, 2, 1))   # (Bb, Wp, Ho)
        else:
            ws_ref[...] = jnp.transpose(acc, (0, 2, 1))             # (Bb, W, Ho)

        # ---- pass 2: max over the W window taps ----------------------------
        acc2 = ws_ref[:, win(0, Wo), :]
        for t in range(1, k):
            acc2 = jnp.maximum(acc2, ws_ref[:, win(t, Wo), :])   # (Bb, Wo, Ho)

        pooled = jnp.transpose(acc2, (0, 2, 1))                  # (Bb, Ho, Wo)
        of_ref[...] = pooled
        # LNS re-encoding: log_base(value).
        # TODO(synk): an all-padding window (not legal in PyTorch) would give
        # log(-inf) = NaN here; no in-kernel guard is added.
        ol_ref[...] = jnp.log(pooled) * inv_ln_base

    return kernel


def _choose_block_b(B, H, W, Hp, Wp, Ho, Wo, padded):
    """Pick how many N*C images to process per grid step.

    Budget: double-buffered input + 2 double-buffered f32 outputs + scratch
    (H-padded copy if needed + transposed H-pooled plane), kept well under the
    32 MiB scoped VMEM so the same tiling is safe on v5e/v6e/v7x.
    """
    per_img = 4 * (2 * H * W                 # input, double buffered
                   + 2 * 2 * Ho * Wo         # two outputs, double buffered
                   + Wp * Ho                 # transposed H-pool scratch
                   + (Hp * W if padded else 0))  # H-padded input scratch
    budget = 12 * 1024 * 1024
    limit = max(1, budget // per_img)
    divs = [v for v in range(1, B + 1) if B % v == 0 and v <= limit]
    bb = max(divs) if divs else 1
    # keep >= 2 grid steps when possible so both v7x TensorCores get work
    if B // bb < 2:
        smaller = [v for v in divs if B // v >= 2]
        if smaller:
            bb = max(smaller)
    return bb


def lns_max_pool2d(x, kernel_size, stride=None, padding=0, dilation=1, base=2.0):
    """Pallas implementation of LNSMaxPool2d.forward for a float NCHW input.

    Returns (pooled_float, pooled_lns_log) where pooled_lns_log is the
    log-domain (base `base`) representation held by the returned LNSTensor.
    """
    k = int(kernel_size)
    s = k if stride is None else int(stride)
    p = int(padding)
    d = int(dilation)

    N, C, H, W = x.shape
    Hp, Wp = H + 2 * p, W + 2 * p
    Ho = (Hp - d * (k - 1) - 1) // s + 1
    Wo = (Wp - d * (k - 1) - 1) // s + 1

    x = x.astype(jnp.float32)
    B = N * C
    xr = x.reshape(B, H, W)                 # flatten N*C; no padding in HBM

    Bb = _choose_block_b(B, H, W, Hp, Wp, Ho, Wo, padded=(p > 0))
    grid = (B // Bb,)

    scratch_shapes = [pltpu.VMEM((Bb, Wp, Ho), jnp.float32)]
    if p > 0:
        scratch_shapes = [pltpu.VMEM((Bb, Hp, W), jnp.float32)] + scratch_shapes

    fused = pl.pallas_call(
        _make_fused_kernel(k, s, p, d, H, W, Ho, Wo, base),
        grid=grid,
        in_specs=[pl.BlockSpec((Bb, H, W), lambda b: (b, 0, 0))],
        out_specs=[pl.BlockSpec((Bb, Ho, Wo), lambda b: (b, 0, 0)),
                   pl.BlockSpec((Bb, Ho, Wo), lambda b: (b, 0, 0))],
        out_shape=(jax.ShapeDtypeStruct((B, Ho, Wo), jnp.float32),
                   jax.ShapeDtypeStruct((B, Ho, Wo), jnp.float32)),
        scratch_shapes=scratch_shapes,
        compiler_params=pltpu.CompilerParams(
            dimension_semantics=("parallel",),
            vmem_limit_bytes=32 * 1024 * 1024),
    )
    zf, zl = fused(xr)                      # (B, Ho, Wo) each, already NCHW order
    return zf.reshape(N, C, Ho, Wo), zl.reshape(N, C, Ho, Wo)


if __name__ == "__main__":
    key = jax.random.PRNGKey(0)
    # positive inputs (valid LNS magnitudes, finite logs)
    x = jax.random.uniform(key, (2, 4, 16, 16), jnp.float32,
                           minval=0.5, maxval=2.0)
    base = 2.0

    def ref_pool(x, k, s, p, d):
        return jax.lax.reduce_window(
            x, -jnp.inf, jax.lax.max,
            window_dimensions=(1, 1, k, k),
            window_strides=(1, 1, s, s),
            padding=[(0, 0), (0, 0), (p, p), (p, p)],
            window_dilation=(1, 1, d, d))

    # config 1: LNSMaxPool2d(kernel_size=3, stride=2, padding=1, dilation=1)
    k1, s1, p1, d1 = 3, 2, 1, 1
    pf1, plog1 = lns_max_pool2d(x, k1, stride=s1, padding=p1,
                                dilation=d1, base=base)
    jax.block_until_ready((pf1, plog1))
    ref1 = ref_pool(x, k1, s1, p1, d1)
    assert pf1.shape == ref1.shape
    assert jnp.allclose(pf1, ref1, atol=1e-6), "float pooling mismatch (cfg1)"
    assert jnp.allclose(plog1, jnp.log(ref1) / math.log(base),
                        atol=1e-5), "LNS log encoding mismatch (cfg1)"

    # config 2: unpadded path, LNSMaxPool2d(kernel_size=2) (stride defaults to 2)
    k2, s2, p2, d2 = 2, 2, 0, 1
    pf2, plog2 = lns_max_pool2d(x, k2, stride=s2, padding=p2,
                                dilation=d2, base=base)
    jax.block_until_ready((pf2, plog2))
    ref2 = ref_pool(x, k2, s2, p2, d2)
    assert pf2.shape == ref2.shape
    assert jnp.allclose(pf2, ref2, atol=1e-6), "float pooling mismatch (cfg2)"
    assert jnp.allclose(plog2, jnp.log(ref2) / math.log(base),
                        atol=1e-5), "LNS log encoding mismatch (cfg2)"

    print("KERNEL_OK")
</pallas_src>

<mosaic_0001>
module attributes {stable_mosaic.version = 11 : i64} {
  func.func @kernel(%arg0: i32, %arg1: memref<4x16x16xf32, #tpu.memory_space<vmem>>, %arg2: memref<4x8x8xf32, #tpu.memory_space<vmem>>, %arg3: memref<4x8x8xf32, #tpu.memory_space<vmem>>, %arg4: memref<4x18x16xf32, #tpu.memory_space<vmem>>, %arg5: memref<4x18x8xf32, #tpu.memory_space<vmem>>) attributes {dimension_semantics = [#tpu.dimension_semantics<parallel>], iteration_bounds = array<i64: 2>, scalar_prefetch = 0 : i64, scratch_operands = 2 : i64, tpu.core_type = #tpu.core_type<tc>, window_params = [{transform_indices = @transform_0, window_bounds = array<i64: 4, 16, 16>}, {transform_indices = @transform_1, window_bounds = array<i64: 4, 8, 8>}, {transform_indices = @transform_2, window_bounds = array<i64: 4, 8, 8>}]} {
    %cst = arith.constant 0xFF800000 : f32
    %0 = vector.broadcast %cst : f32 to vector<4x18x16xf32>
    %c0 = arith.constant 0 : index
    %c0_0 = arith.constant 0 : index
    %c0_1 = arith.constant 0 : index
    %1 = vector.load %arg4[%c0, %c0_0, %c0_1] : memref<4x18x16xf32, #tpu.memory_space<vmem>>, vector<4x18x16xf32>
    tpu.vector_store %arg4[%c0, %c0_0, %c0_1], %0 {strides = array<i32>} : memref<4x18x16xf32, #tpu.memory_space<vmem>>, vector<4x18x16xf32>,
    %c0_2 = arith.constant 0 : index
    %c0_3 = arith.constant 0 : index
    %c0_4 = arith.constant 0 : index
    %2 = vector.load %arg1[%c0_2, %c0_3, %c0_4] : memref<4x16x16xf32, #tpu.memory_space<vmem>>, vector<4x16x16xf32>
    %c0_5 = arith.constant 0 : index
    %c1 = arith.constant 1 : index
    %c0_6 = arith.constant 0 : index
    %3 = vector.load %arg4[%c0_5, %c1, %c0_6] : memref<4x18x16xf32, #tpu.memory_space<vmem>>, vector<4x16x16xf32>
    tpu.vector_store %arg4[%c0_5, %c1, %c0_6], %2 {strides = array<i32>} : memref<4x18x16xf32, #tpu.memory_space<vmem>>, vector<4x16x16xf32>,
    %c0_7 = arith.constant 0 : index
    %c0_8 = arith.constant 0 : index
    %c0_9 = arith.constant 0 : index
    %4 = tpu.strided_load %arg4[%c0_7, %c0_8, %c0_9] {strides = array<i32: 1, 2, 1>} : memref<4x18x16xf32, #tpu.memory_space<vmem>>, vector<4x8x16xf32>
    %c0_10 = arith.constant 0 : index
    %c1_11 = arith.constant 1 : index
    %c0_12 = arith.constant 0 : index
    %5 = tpu.strided_load %arg4[%c0_10, %c1_11, %c0_12] {strides = array<i32: 1, 2, 1>} : memref<4x18x16xf32, #tpu.memory_space<vmem>>, vector<4x8x16xf32>
    %6 = arith.maximumf %4, %5 : vector<4x8x16xf32>
    %c0_13 = arith.constant 0 : index
    %c2 = arith.constant 2 : index
    %c0_14 = arith.constant 0 : index
    %7 = tpu.strided_load %arg4[%c0_13, %c2, %c0_14] {strides = array<i32: 1, 2, 1>} : memref<4x18x16xf32, #tpu.memory_space<vmem>>, vector<4x8x16xf32>
    %8 = arith.maximumf %6, %7 : vector<4x8x16xf32>
    %cst_15 = arith.constant 0xFF800000 : f32
    %9 = vector.broadcast %cst_15 : f32 to vector<4x18x8xf32>
    %c0_16 = arith.constant 0 : index
    %c0_17 = arith.constant 0 : index
    %c0_18 = arith.constant 0 : index
    %10 = vector.load %arg5[%c0_16, %c0_17, %c0_18] : memref<4x18x8xf32, #tpu.memory_space<vmem>>, vector<4x18x8xf32>
    tpu.vector_store %arg5[%c0_16, %c0_17, %c0_18], %9 {strides = array<i32>} : memref<4x18x8xf32, #tpu.memory_space<vmem>>, vector<4x18x8xf32>,
    %11 = tpu.transpose %8, [0, 2, 1] : vector<4x8x16xf32> -> vector<4x16x8xf32>
    %c0_19 = arith.constant 0 : index
    %c1_20 = arith.constant 1 : index
    %c0_21 = arith.constant 0 : index
    %12 = vector.load %arg5[%c0_19, %c1_20, %c0_21] : memref<4x18x8xf32, #tpu.memory_space<vmem>>, vector<4x16x8xf32>
    tpu.vector_store %arg5[%c0_19, %c1_20, %c0_21], %11 {strides = array<i32>} : memref<4x18x8xf32, #tpu.memory_space<vmem>>, vector<4x16x8xf32>,
    %c0_22 = arith.constant 0 : index
    %c0_23 = arith.constant 0 : index
    %c0_24 = arith.constant 0 : index
    %13 = tpu.strided_load %arg5[%c0_22, %c0_23, %c0_24] {strides = array<i32: 1, 2, 1>} : memref<4x18x8xf32, #tpu.memory_space<vmem>>, vector<4x8x8xf32>
    %c0_25 = arith.constant 0 : index
    %c1_26 = arith.constant 1 : index
    %c0_27 = arith.constant 0 : index
    %14 = tpu.strided_load %arg5[%c0_25, %c1_26, %c0_27] {strides = array<i32: 1, 2, 1>} : memref<4x18x8xf32, #tpu.memory_space<vmem>>, vector<4x8x8xf32>
    %15 = arith.maximumf %13, %14 : vector<4x8x8xf32>
    %c0_28 = arith.constant 0 : index
    %c2_29 = arith.constant 2 : index
    %c0_30 = arith.constant 0 : index
    %16 = tpu.strided_load %arg5[%c0_28, %c2_29, %c0_30] {strides = array<i32: 1, 2, 1>} : memref<4x18x8xf32, #tpu.memory_space<vmem>>, vector<4x8x8xf32>
    %17 = arith.maximumf %15, %16 : vector<4x8x8xf32>
    %18 = tpu.transpose %17, [0, 2, 1] : vector<4x8x8xf32> -> vector<4x8x8xf32>
    %c0_31 = arith.constant 0 : index
    %c0_32 = arith.constant 0 : index
    %c0_33 = arith.constant 0 : index
    %19 = vector.load %arg2[%c0_31, %c0_32, %c0_33] : memref<4x8x8xf32, #tpu.memory_space<vmem>>, vector<4x8x8xf32>
    tpu.vector_store %arg2[%c0_31, %c0_32, %c0_33], %18 {strides = array<i32>} : memref<4x8x8xf32, #tpu.memory_space<vmem>>, vector<4x8x8xf32>,
    %20 = math.log %18 : vector<4x8x8xf32>
    %cst_34 = arith.constant 1.44269502 : f32
    %21 = vector.broadcast %cst_34 : f32 to vector<4x8x8xf32>
    %22 = arith.mulf %20, %21 : vector<4x8x8xf32>
    %c0_35 = arith.constant 0 : index
    %c0_36 = arith.constant 0 : index
    %c0_37 = arith.constant 0 : index
    %23 = vector.load %arg3[%c0_35, %c0_36, %c0_37] : memref<4x8x8xf32, #tpu.memory_space<vmem>>, vector<4x8x8xf32>
    tpu.vector_store %arg3[%c0_35, %c0_36, %c0_37], %22 {strides = array<i32>} : memref<4x8x8xf32, #tpu.memory_space<vmem>>, vector<4x8x8xf32>,
    return
  }
  func.func @transform_0(%arg0: i32) -> (i32, i32, i32) {
    %c0_i32 = arith.constant 0 : i32
    %c0_i32_0 = arith.constant 0 : i32
    %c0_i32_1 = arith.constant 0 : i32
    return %arg0, %c0_i32, %c0_i32_0 : i32, i32, i32
  }
  func.func @transform_1(%arg0: i32) -> (i32, i32, i32) {
    %c0_i32 = arith.constant 0 : i32
    %c0_i32_0 = arith.constant 0 : i32
    %c0_i32_1 = arith.constant 0 : i32
    return %arg0, %c0_i32, %c0_i32_0 : i32, i32, i32
  }
  func.func @transform_2(%arg0: i32) -> (i32, i32, i32) {
    %c0_i32 = arith.constant 0 : i32
    %c0_i32_0 = arith.constant 0 : i32
    %c0_i32_1 = arith.constant 0 : i32
    return %arg0, %c0_i32, %c0_i32_0 : i32, i32, i32
  }
}

</mosaic_0001>

<llo_original>
// kernel: tpu_custom_call.1
$region0: #{tpu_custom_call.1}
  #allocation0 [shape = 'u32[]', space=smem, size = 0x4, offset = 0x4, fixed_abs, tag = 'smem constant byte address 0x4 - core index']
  #allocation1 [shape = 'u32[72,128]{1,0:T(1,128)}', space=vmem, size = 0x9000, scoped, tag = 'internal scratch']
  #allocation2 [shape = 'f32[4,18,16]{2,1,0:T(8,128)}', space=vmem, size = 0xc000, scoped, tag = 'scratch operand']
  #allocation3 [shape = 'f32[4,18,8]{2,1,0:T(8,128)}', space=vmem, size = 0xc000, scoped, tag = 'scratch operand']
  %s0 = inlined_call_operand.hbm [shape: f32[8,16,16], index: 0, kind: input, shape index: {}]
  %s1 = inlined_call_operand.hbm [shape: f32[8,8,8], index: 1, kind: output, shape index: {0}]
  %s2 = inlined_call_operand.hbm [shape: f32[8,8,8], index: 2, kind: output, shape index: {1}]
  %3 = xla_tuple %s1, %s2
  %s4 = sld [smem:[#allocation0]]
  $region49: #{tpu_custom_call.1} parent=0
    _
  %s6 = ssub.s32 1, %s4
  %s7 = scalar_select 0, %s6, %s4
  $region1: #{tpu_custom_call.1} parent=0
    #allocation4 [shape = 'u8[65536]{0}', space=vmem, size = 0x10000, scoped, tag = 'input window, operand 0']
    #allocation5 [shape = 's32[2]{0}', space=sflag, size = 0x8, scoped, tag = 'scoped memory for tpu_custom_call.1']
    #allocation6 [shape = 's32[2]{0}', space=sflag, size = 0x8, scoped, tag = 'scoped memory for tpu_custom_call.1']
    #allocation7 [shape = 'u8[32768]{0}', space=vmem, size = 0x8000, scoped, tag = 'output window, operand 0']
    #allocation8 [shape = 'u8[32768]{0}', space=vmem, size = 0x8000, scoped, tag = 'output window, operand 1']
    #allocation9 [shape = 's32[2]{0}', space=sflag, size = 0x8, scoped, tag = 'scoped memory for tpu_custom_call.1']
    %8 = vsyncpa [#allocation5], 0
    %s9 = scalar_lea.sflag [#allocation5], 1
    %10 = vsyncpa %s9, 0
    %11 = vsyncpa [#allocation6], 0
    %s12 = scalar_lea.sflag [#allocation6], 1
    %13 = vsyncpa %s12, 0
    %14 = vsyncpa [#allocation9], 0
    %s15 = scalar_lea.sflag [#allocation9], 1
    %16 = vsyncpa %s15, 0
    loop: start=0, step=1, limit=4
    $region2: #{tpu_custom_call.1} parent=1 // loop_pre_header
      _
    $region3: #{tpu_custom_call.1} parent=1 // loop_header
      %s18 = sphi 0, %s22
      %p19 = scmp.ge.s32.totalorder %s18, 4
      %s28 = sphi 0, %s30
      %s31 = sphi 0, %s28
      %s32 = sphi 0, %s31
      %s48 = sphi 0, %s32
      %s54 = sphi 0, %s56
      %s57 = sphi 0, %s54
      %s58 = sphi 0, %s57
      %s74 = sphi 0, %s58
      %s80 = sphi 0, %s82
      %s83 = sphi 0, %s80
      %s84 = sphi 0, %s83
      %s100 = sphi 0, %s84
    $region4: #{tpu_custom_call.1} parent=1 // loop_header_branch
      %21 = sbr.rel (%p19) target = $region8
    $region5: #{tpu_custom_call.1} parent=1 // loop_body
      %s23 = ssub.s32 %s18, 1
      %s24 = ssub.s32 %s18, 2
      %s25 = sadd.s32 %s18, 1
      %s26 = ssub.s32 %s18, %s25
      %p27 = scmp.eq.s32.totalorder %s26, 0
      %s29 = sadd.s32 %s28, 1
      %s30 = scalar_select %p27, %s28, %s29
      %p33 = pneg %p27
      %p34 = scmp.eq.s32.totalorder %s18, 1
      %p35 = por %p33, %p34
      %p36 = scmp.ne.s32.totalorder %s28, %s31
      %p37 = scmp.eq.s32.totalorder %s18, 0
      %p38 = por %p36, %p37
      %p39 = scmp.ne.s32.totalorder %s28, %s31
      %p40 = scmp.eq.s32.totalorder %s23, 1
      %p41 = por %p39, %p40
      %p42 = scmp.ne.s32.totalorder %s31, %s32
      %p43 = scmp.eq.s32.totalorder %s23, 0
      %p44 = por %p42, %p43
      %p45 = scmp.ne.s32.totalorder %s31, %s32
      %p46 = scmp.eq.s32.totalorder %s24, 1
      %p47 = por %p45, %p46
      %p49 = scmp.ne.s32.totalorder %s32, %s48
      %p50 = scmp.eq.s32.totalorder %s24, 0
      %p51 = por %p49, %p50
      %s52 = ssub.s32 %s18, %s25
      %p53 = scmp.eq.s32.totalorder %s52, 0
      %s55 = sadd.s32 %s54, 1
      %s56 = scalar_select %p53, %s54, %s55
      %p59 = pneg %p53
      %p60 = scmp.eq.s32.totalorder %s18, 1
      %p61 = por %p59, %p60
      %p62 = scmp.ne.s32.totalorder %s54, %s57
      %p63 = scmp.eq.s32.totalorder %s18, 0
      %p64 = por %p62, %p63
      %p65 = scmp.ne.s32.totalorder %s54, %s57
      %p66 = scmp.eq.s32.totalorder %s23, 1
      %p67 = por %p65, %p66
      %p68 = scmp.ne.s32.totalorder %s57, %s58
      %p69 = scmp.eq.s32.totalorder %s23, 0
      %p70 = por %p68, %p69
      %p71 = scmp.ne.s32.totalorder %s57, %s58
      %p72 = scmp.eq.s32.totalorder %s24, 1
      %p73 = por %p71, %p72
      %p75 = scmp.ne.s32.totalorder %s58, %s74
      %p76 = scmp.eq.s32.totalorder %s24, 0
      %p77 = por %p75, %p76
      %s78 = ssub.s32 %s18, %s25
      %p79 = scmp.eq.s32.totalorder %s78, 0
      %s81 = sadd.s32 %s80, 1
      %s82 = scalar_select %p79, %s80, %s81
      %p85 = pneg %p79
      %p86 = scmp.eq.s32.totalorder %s18, 1
      %p87 = por %p85, %p86
      %p88 = scmp.ne.s32.totalorder %s80, %s83
      %p89 = scmp.eq.s32.totalorder %s18, 0
      %p90 = por %p88, %p89
      %p91 = scmp.ne.s32.totalorder %s80, %s83
      %p92 = scmp.eq.s32.totalorder %s23, 1
      %p93 = por %p91, %p92
      %p94 = scmp.ne.s32.totalorder %s83, %s84
      %p95 = scmp.eq.s32.totalorder %s23, 0
      %p96 = por %p94, %p95
      %p97 = scmp.ne.s32.totalorder %s83, %s84
      %p98 = scmp.eq.s32.totalorder %s24, 1
      %p99 = por %p97, %p98
      %p101 = scmp.ne.s32.totalorder %s84, %s100
      %p102 = scmp.eq.s32.totalorder %s24, 0
      %p103 = por %p101, %p102
      %p104 = scmp.le.s32.totalorder 1, %s18
      %p105 = scmp.lt.s32.totalorder %s18, 3
      %p106 = pnand %p104, %p105
      %p107 = pneg %p106
      // Predicated region
      $region9: #{tpu_custom_call.1} parent=5 // pred_check
        _
      $region10: #{tpu_custom_call.1} parent=5 // pred_check_branch
        %109 = sbr.rel (%p106) target = $region12
      $region11: #{tpu_custom_call.1} parent=5 // pred_region
        %s110 = ssub.s32 %s18, 1
      $region12: #{tpu_custom_call.1} parent=5 // pred_fallthru
        _
      %p111 = scmp.lt.s32.totalorder %s18, 2
      // Predicated region
      $region13: #{tpu_custom_call.1} parent=5 // pred_check
        %p112 = pneg %p111
      $region14: #{tpu_custom_call.1} parent=5 // pred_check_branch
        %114 = sbr.rel (%p112) target = $region16
      $region15: #{tpu_custom_call.1} parent=5 // pred_region
        // Predicated region
        $region17: #{tpu_custom_call.1} parent=15 // pred_check
          %p115 = pneg %p38
        $region18: #{tpu_custom_call.1} parent=15 // pred_check_branch
          %117 = sbr.rel (%p115) target = $region20
        $region19: #{tpu_custom_call.1} parent=15 // pred_region
          %s118 = sand.u32 %s28, 1
          %s119 = scalar_lea.sflag [#allocation5], %s118
          %s120 = sand.u32 %s28, 1
          %s121 = smul.addr %s120, 64
          %s122 = scalar_lea.vmem [#allocation4], %s121
          %s123 = smul.u32 4, %s18
          %125 = vsyncadd %s119, 0
          %s126 = smul.addr %s123, 2
          %s127 = smul.addr %s126, 8
          %s128 = scalar_lea.hbm %s0, %s127
          %s129 = sshll.u32 %s128, 4
          %s130 = int_to_ptr.hbm [resolvable:$true] %s129
          %s131 = sshll.u32 %s122, 4
          %s132 = int_to_ptr.vmem [resolvable:$true] %s131
          %137 = dma.hbm_to_vmem [thread:$0]  %s130, 1024, %s132, %s119, 128, 128, 8
        $region20: #{tpu_custom_call.1} parent=15 // pred_fallthru
          _
      $region16: #{tpu_custom_call.1} parent=5 // pred_fallthru
        _
      %p138 = scmp.le.s32.totalorder 1, %s18
      %p139 = scmp.lt.s32.totalorder %s18, 3
      %p140 = pnand %p138, %p139
      %p141 = pneg %p140
      // Predicated region
      $region21: #{tpu_custom_call.1} parent=5 // pred_check
        _
      $region22: #{tpu_custom_call.1} parent=5 // pred_check_branch
        %143 = sbr.rel (%p140) target = $region24
      $region23: #{tpu_custom_call.1} parent=5 // pred_region
        %s144 = ssub.s32 %s18, 1
        %s145 = sand.u32 %s31, 1
        %s146 = scalar_lea.sflag [#allocation5], %s145
        %s147 = sand.u32 %s31, 1
        %s148 = smul.addr %s147, 64
        %s149 = scalar_lea.vmem [#allocation4], %s148
        // Predicated region
        $region25: #{tpu_custom_call.1} parent=23 // pred_check
          %p150 = pneg %p44
        $region26: #{tpu_custom_call.1} parent=23 // pred_check_branch
          %152 = sbr.rel (%p150) target = $region28
        $region27: #{tpu_custom_call.1} parent=23 // pred_region
          %154 = dma.done %s146, 1024
        $region28: #{tpu_custom_call.1} parent=23 // pred_fallthru
          _
        %s155 = sand.u32 %s31, 1
        %s156 = scalar_lea.sflag [#allocation5], %s155
        %s157 = sand.u32 %s31, 1
        %s158 = smul.addr %s157, 64
        %s159 = scalar_lea.vmem [#allocation4], %s158
        %p160 = pneg %p44
        %p161 = pneg %p41
        %p162 = pneg %p70
        %p163 = pneg %p67
        %s164 = sand.u32 %s57, 1
        %s165 = scalar_lea.sflag [#allocation6], %s164
        %s166 = sand.u32 %s57, 1
        %s167 = smul.addr %s166, 32
        %s168 = scalar_lea.vmem [#allocation7], %s167
        %p169 = pneg %p96
        %p170 = pneg %p93
        %s171 = sand.u32 %s83, 1
        %s172 = scalar_lea.sflag [#allocation9], %s171
        %s173 = sand.u32 %s83, 1
        %s174 = smul.addr %s173, 32
        %s175 = scalar_lea.vmem [#allocation8], %s174
        %s176 = smul.u32 4, %s23
        %s177 = smul.u32 4, %s23
        %s178 = smul.u32 4, %s23
        %vm179 = vcmask 130048
        %180 = vst.msk [vmem:[#allocation2] sm:$0xff] %vm179, -inf
        %181 = vst.msk [vmem:[#allocation2 + $0x8] sm:$0xff] %vm179, -inf
        %vm182 = vcmask 123904
        %183 = vst.msk [vmem:[#allocation2 + $0x10] sm:$0x3] %vm182, -inf
        %184 = vst.msk [vmem:[#allocation2 + $0x18] sm:$0xff] %vm179, -inf
        %185 = vst.msk [vmem:[#allocation2 + $0x20] sm:$0xff] %vm179, -inf
        %186 = vst.msk [vmem:[#allocation2 + $0x28] sm:$0x3] %vm182, -inf
        %187 = vst.msk [vmem:[#allocation2 + $0x30] sm:$0xff] %vm179, -inf
        %188 = vst.msk [vmem:[#allocation2 + $0x38] sm:$0xff] %vm179, -inf
        %189 = vst.msk [vmem:[#allocation2 + $0x40] sm:$0x3] %vm182, -inf
        %190 = vst.msk [vmem:[#allocation2 + $0x48] sm:$0xff] %vm179, -inf
        %191 = vst.msk [vmem:[#allocation2 + $0x50] sm:$0xff] %vm179, -inf
        %192 = vst.msk [vmem:[#allocation2 + $0x58] sm:$0x3] %vm182, -inf
        %v193 = vld [vmem:[%s149] sm:$0xff]
        %v194 = vld [vmem:[%s149 + $0x8] sm:$0xff]
        %v195 = vld [vmem:[%s149 + $0x10] sm:$0xff]
        %v196 = vld [vmem:[%s149 + $0x18] sm:$0xff]
        %v197 = vld [vmem:[%s149 + $0x20] sm:$0xff]
        %v198 = vld [vmem:[%s149 + $0x28] sm:$0xff]
        %v199 = vld [vmem:[%s149 + $0x30] sm:$0xff]
        %v200 = vld [vmem:[%s149 + $0x38] sm:$0xff]
        %201 = vst.msk [vmem:[#allocation2 + $0x1] sm:$0xff] %vm179, %v193
        %202 = vst.msk [vmem:[#allocation2 + $0x9] sm:$0xff] %vm179, %v194
        %203 = vst.msk [vmem:[#allocation2 + $0x19] sm:$0xff] %vm179, %v195
        %204 = vst.msk [vmem:[#allocation2 + $0x21] sm:$0xff] %vm179, %v196
        %205 = vst.msk [vmem:[#allocation2 + $0x31] sm:$0xff] %vm179, %v197
        %206 = vst.msk [vmem:[#allocation2 + $0x39] sm:$0xff] %vm179, %v198
        %207 = vst.msk [vmem:[#allocation2 + $0x49] sm:$0xff] %vm179, %v199
        %208 = vst.msk [vmem:[#allocation2 + $0x51] sm:$0xff] %vm179, %v200
        %v209 = vld [vmem:[#allocation2] ss:$2 sm:$0xff]
        %s210 = scalar_lea.vmem [#allocation2], 24
        %v211 = vld [vmem:[%s210] ss:$2 sm:$0xff]
        %s212 = scalar_lea.vmem [#allocation2], 48
        %v213 = vld [vmem:[%s212] ss:$2 sm:$0xff]
        %s214 = scalar_lea.vmem [#allocation2], 72
        %v215 = vld [vmem:[%s214] ss:$2 sm:$0xff]
        %s216 = scalar_lea.vmem [#allocation2], 1
        %v217 = vld [vmem:[%s216] ss:$2 sm:$0xff]
        %s218 = scalar_lea.vmem [#allocation2], 25
        %v219 = vld [vmem:[%s218] ss:$2 sm:$0xff]
        %s220 = scalar_lea.vmem [#allocation2], 49
        %v221 = vld [vmem:[%s220] ss:$2 sm:$0xff]
        %s222 = scalar_lea.vmem [#allocation2], 73
        %v223 = vld [vmem:[%s222] ss:$2 sm:$0xff]
        %v224 = vmax.f32 %v209, %v217
        %v225 = vmax.f32 %v211, %v219
        %v226 = vmax.f32 %v213, %v221
        %v227 = vmax.f32 %v215, %v223
        %s228 = scalar_lea.vmem [#allocation2], 2
        %v229 = vld [vmem:[%s228] ss:$2 sm:$0xff]
        %s230 = scalar_lea.vmem [#allocation2], 26
        %v231 = vld [vmem:[%s230] ss:$2 sm:$0xff]
        %s232 = scalar_lea.vmem [#allocation2], 50
        %v233 = vld [vmem:[%s232] ss:$2 sm:$0xff]
        %s234 = scalar_lea.vmem [#allocation2], 74
        %v235 = vld [vmem:[%s234] ss:$2 sm:$0xff]
        %v236 = vmax.f32 %v224, %v229
        %v237 = vmax.f32 %v225, %v231
        %v238 = vmax.f32 %v226, %v233
        %v239 = vmax.f32 %v227, %v235
        %vm240 = vcmask 64512
        %241 = vst.msk [vmem:[#allocation3] sm:$0xff] %vm240, -inf
        %242 = vst.msk [vmem:[#allocation3 + $0x8] sm:$0xff] %vm240, -inf
        %vm243 = vcmask 58368
        %244 = vst.msk [vmem:[#allocation3 + $0x10] sm:$0x3] %vm243, -inf
        %245 = vst.msk [vmem:[#allocation3 + $0x18] sm:$0xff] %vm240, -inf
        %246 = vst.msk [vmem:[#allocation3 + $0x20] sm:$0xff] %vm240, -inf
        %247 = vst.msk [vmem:[#allocation3 + $0x28] sm:$0x3] %vm243, -inf
        %248 = vst.msk [vmem:[#allocation3 + $0x30] sm:$0xff] %vm240, -inf
        %249 = vst.msk [vmem:[#allocation3 + $0x38] sm:$0xff] %vm240, -inf
        %250 = vst.msk [vmem:[#allocation3 + $0x40] sm:$0x3] %vm243, -inf
        %251 = vst.msk [vmem:[#allocation3 + $0x48] sm:$0xff] %vm240, -inf
        %252 = vst.msk [vmem:[#allocation3 + $0x50] sm:$0xff] %vm240, -inf
        %253 = vst.msk [vmem:[#allocation3 + $0x58] sm:$0x3] %vm243, -inf
        %254 = vxpose.xlu0.b32.start [1/16] %v236, 128
        %255 = vxpose.xlu0.b32.cont [2/16] 0.0, 128
        %256 = vxpose.xlu0.b32.cont [3/16] 0.0, 128
        %257 = vxpose.xlu0.b32.cont [4/16] 0.0, 128
        %258 = vxpose.xlu0.b32.cont [5/16] 0.0, 128
        %259 = vxpose.xlu0.b32.cont [6/16] 0.0, 128
        %260 = vxpose.xlu0.b32.cont [7/16] 0.0, 128
        %261 = vxpose.xlu0.b32.cont [8/16] 0.0, 128
        %262 = vxpose.xlu0.b32.cont [9/16] 0.0, 128
        %263 = vxpose.xlu0.b32.cont [10/16] 0.0, 128
        %264 = vxpose.xlu0.b32.cont [11/16] 0.0, 128
        %265 = vxpose.xlu0.b32.cont [12/16] 0.0, 128
        %266 = vxpose.xlu0.b32.cont [13/16] 0.0, 128
        %267 = vxpose.xlu0.b32.cont [14/16] 0.0, 128
        %268 = vxpose.xlu0.b32.cont [15/16] 0.0, 128
        %269 = vxpose.xlu0.b32.end [16/16] 0.0, 128
        %v270 = vpop.trf.xlu0
        %v271 = vpop.trf.xlu0
        %v272 = vpop.trf.xlu0
        %v273 = vpop.trf.xlu0
        %v274 = vpop.trf.xlu0
        %v275 = vpop.trf.xlu0
        %v276 = vpop.trf.xlu0
        %v277 = vpop.trf.xlu0
        %v278 = vpop.trf.xlu0
        %v279 = vpop.trf.xlu0
        %v280 = vpop.trf.xlu0
        %v281 = vpop.trf.xlu0
        %v282 = vpop.trf.xlu0
        %v283 = vpop.trf.xlu0
        %v284 = vpop.trf.xlu0
        %v285 = vpop.trf.xlu0
        %286 = vxpose.xlu0.b32.start [1/16] %v237, 128
        %287 = vxpose.xlu0.b32.cont [2/16] 0.0, 128
        %288 = vxpose.xlu0.b32.cont [3/16] 0.0, 128
        %289 = vxpose.xlu0.b32.cont [4/16] 0.0, 128
        %290 = vxpose.xlu0.b32.cont [5/16] 0.0, 128
        %291 = vxpose.xlu0.b32.cont [6/16] 0.0, 128
        %292 = vxpose.xlu0.b32.cont [7/16] 0.0, 128
        %293 = vxpose.xlu0.b32.cont [8/16] 0.0, 128
        %294 = vxpose.xlu0.b32.cont [9/16] 0.0, 128
        %295 = vxpose.xlu0.b32.cont [10/16] 0.0, 128
        %296 = vxpose.xlu0.b32.cont [11/16] 0.0, 128
        %297 = vxpose.xlu0.b32.cont [12/16] 0.0, 128
        %298 = vxpose.xlu0.b32.cont [13/16] 0.0, 128
        %299 = vxpose.xlu0.b32.cont [14/16] 0.0, 128
        %300 = vxpose.xlu0.b32.cont [15/16] 0.0, 128
        %301 = vxpose.xlu0.b32.end [16/16] 0.0, 128
        %v302 = vpop.trf.xlu0
        %v303 = vpop.trf.xlu0
        %v304 = vpop.trf.xlu0
        %v305 = vpop.trf.xlu0
        %v306 = vpop.trf.xlu0
        %v307 = vpop.trf.xlu0
        %v308 = vpop.trf.xlu0
        %v309 = vpop.trf.xlu0
        %v310 = vpop.trf.xlu0
        %v311 = vpop.trf.xlu0
        %v312 = vpop.trf.xlu0
        %v313 = vpop.trf.xlu0
        %v314 = vpop.trf.xlu0
        %v315 = vpop.trf.xlu0
        %v316 = vpop.trf.xlu0
        %v317 = vpop.trf.xlu0
        %318 = vxpose.xlu0.b32.start [1/16] %v238, 128
        %319 = vxpose.xlu0.b32.cont [2/16] 0.0, 128
        %320 = vxpose.xlu0.b32.cont [3/16] 0.0, 128
        %321 = vxpose.xlu0.b32.cont [4/16] 0.0, 128
        %322 = vxpose.xlu0.b32.cont [5/16] 0.0, 128
        %323 = vxpose.xlu0.b32.cont [6/16] 0.0, 128
        %324 = vxpose.xlu0.b32.cont [7/16] 0.0, 128
        %325 = vxpose.xlu0.b32.cont [8/16] 0.0, 128
        %326 = vxpose.xlu0.b32.cont [9/16] 0.0, 128
        %327 = vxpose.xlu0.b32.cont [10/16] 0.0, 128
        %328 = vxpose.xlu0.b32.cont [11/16] 0.0, 128
        %329 = vxpose.xlu0.b32.cont [12/16] 0.0, 128
        %330 = vxpose.xlu0.b32.cont [13/16] 0.0, 128
        %331 = vxpose.xlu0.b32.cont [14/16] 0.0, 128
        %332 = vxpose.xlu0.b32.cont [15/16] 0.0, 128
        %333 = vxpose.xlu0.b32.end [16/16] 0.0, 128
        %v334 = vpop.trf.xlu0
        %v335 = vpop.trf.xlu0
        %v336 = vpop.trf.xlu0
        %v337 = vpop.trf.xlu0
        %v338 = vpop.trf.xlu0
        %v339 = vpop.trf.xlu0
        %v340 = vpop.trf.xlu0
        %v341 = vpop.trf.xlu0
        %v342 = vpop.trf.xlu0
        %v343 = vpop.trf.xlu0
        %v344 = vpop.trf.xlu0
        %v345 = vpop.trf.xlu0
        %v346 = vpop.trf.xlu0
        %v347 = vpop.trf.xlu0
        %v348 = vpop.trf.xlu0
        %v349 = vpop.trf.xlu0
        %350 = vxpose.xlu0.b32.start [1/16] %v239, 128
        %351 = vxpose.xlu0.b32.cont [2/16] 0.0, 128
        %352 = vxpose.xlu0.b32.cont [3/16] 0.0, 128
        %353 = vxpose.xlu0.b32.cont [4/16] 0.0, 128
        %354 = vxpose.xlu0.b32.cont [5/16] 0.0, 128
        %355 = vxpose.xlu0.b32.cont [6/16] 0.0, 128
        %356 = vxpose.xlu0.b32.cont [7/16] 0.0, 128
        %357 = vxpose.xlu0.b32.cont [8/16] 0.0, 128
        %358 = vxpose.xlu0.b32.cont [9/16] 0.0, 128
        %359 = vxpose.xlu0.b32.cont [10/16] 0.0, 128
        %360 = vxpose.xlu0.b32.cont [11/16] 0.0, 128
        %361 = vxpose.xlu0.b32.cont [12/16] 0.0, 128
        %362 = vxpose.xlu0.b32.cont [13/16] 0.0, 128
        %363 = vxpose.xlu0.b32.cont [14/16] 0.0, 128
        %364 = vxpose.xlu0.b32.cont [15/16] 0.0, 128
        %365 = vxpose.xlu0.b32.end [16/16] 0.0, 128
        %v366 = vpop.trf.xlu0
        %v367 = vpop.trf.xlu0
        %v368 = vpop.trf.xlu0
        %v369 = vpop.trf.xlu0
        %v370 = vpop.trf.xlu0
        %v371 = vpop.trf.xlu0
        %v372 = vpop.trf.xlu0
        %v373 = vpop.trf.xlu0
        %v374 = vpop.trf.xlu0
        %v375 = vpop.trf.xlu0
        %v376 = vpop.trf.xlu0
        %v377 = vpop.trf.xlu0
        %v378 = vpop.trf.xlu0
        %v379 = vpop.trf.xlu0
        %v380 = vpop.trf.xlu0
        %v381 = vpop.trf.xlu0
        %382 = vst.msk [vmem:[#allocation3 + $0x1] sm:$0xff] %vm240, %v270
        %383 = vst.msk [vmem:[#allocation3 + $0x9] sm:$0xff] %vm240, %v271
        %384 = vst.msk [vmem:[#allocation3 + $0x19] sm:$0xff] %vm240, %v302
        %385 = vst.msk [vmem:[#allocation3 + $0x21] sm:$0xff] %vm240, %v303
        %386 = vst.msk [vmem:[#allocation3 + $0x31] sm:$0xff] %vm240, %v334
        %387 = vst.msk [vmem:[#allocation3 + $0x39] sm:$0xff] %vm240, %v335
        %388 = vst.msk [vmem:[#allocation3 + $0x49] sm:$0xff] %vm240, %v366
        %389 = vst.msk [vmem:[#allocation3 + $0x51] sm:$0xff] %vm240, %v367
        %v390 = vld [vmem:[#allocation3] ss:$2 sm:$0xff]
        %s391 = scalar_lea.vmem [#allocation3], 24
        %v392 = vld [vmem:[%s391] ss:$2 sm:$0xff]
        %s393 = scalar_lea.vmem [#allocation3], 48
        %v394 = vld [vmem:[%s393] ss:$2 sm:$0xff]
        %s395 = scalar_lea.vmem [#allocation3], 72
        %v396 = vld [vmem:[%s395] ss:$2 sm:$0xff]
        %s397 = scalar_lea.vmem [#allocation3], 1
        %v398 = vld [vmem:[%s397] ss:$2 sm:$0xff]
        %s399 = scalar_lea.vmem [#allocation3], 25
        %v400 = vld [vmem:[%s399] ss:$2 sm:$0xff]
        %s401 = scalar_lea.vmem [#allocation3], 49
        %v402 = vld [vmem:[%s401] ss:$2 sm:$0xff]
        %s403 = scalar_lea.vmem [#allocation3], 73
        %v404 = vld [vmem:[%s403] ss:$2 sm:$0xff]
        %v405 = vmax.f32 %v390, %v398
        %v406 = vmax.f32 %v392, %v400
        %v407 = vmax.f32 %v394, %v402
        %v408 = vmax.f32 %v396, %v404
        %s409 = scalar_lea.vmem [#allocation3], 2
        %v410 = vld [vmem:[%s409] ss:$2 sm:$0xff]
        %s411 = scalar_lea.vmem [#allocation3], 26
        %v412 = vld [vmem:[%s411] ss:$2 sm:$0xff]
        %s413 = scalar_lea.vmem [#allocation3], 50
        %v414 = vld [vmem:[%s413] ss:$2 sm:$0xff]
        %s415 = scalar_lea.vmem [#allocation3], 74
        %v416 = vld [vmem:[%s415] ss:$2 sm:$0xff]
        %v417 = vmax.f32 %v405, %v410
        %v418 = vmax.f32 %v406, %v412
        %v419 = vmax.f32 %v407, %v414
        %v420 = vmax.f32 %v408, %v416
        %421 = vxpose.xlu0.b32.start [1/16] %v417, 128
        %422 = vxpose.xlu0.b32.cont [2/16] 0.0, 128
        %423 = vxpose.xlu0.b32.cont [3/16] 0.0, 128
        %424 = vxpose.xlu0.b32.cont [4/16] 0.0, 128
        %425 = vxpose.xlu0.b32.cont [5/16] 0.0, 128
        %426 = vxpose.xlu0.b32.cont [6/16] 0.0, 128
        %427 = vxpose.xlu0.b32.cont [7/16] 0.0, 128
        %428 = vxpose.xlu0.b32.cont [8/16] 0.0, 128
        %429 = vxpose.xlu0.b32.cont [9/16] 0.0, 128
        %430 = vxpose.xlu0.b32.cont [10/16] 0.0, 128
        %431 = vxpose.xlu0.b32.cont [11/16] 0.0, 128
        %432 = vxpose.xlu0.b32.cont [12/16] 0.0, 128
        %433 = vxpose.xlu0.b32.cont [13/16] 0.0, 128
        %434 = vxpose.xlu0.b32.cont [14/16] 0.0, 128
        %435 = vxpose.xlu0.b32.cont [15/16] 0.0, 128
        %436 = vxpose.xlu0.b32.end [16/16] 0.0, 128
        %v437 = vpop.trf.xlu0
        %v438 = vpop.trf.xlu0
        %v439 = vpop.trf.xlu0
        %v440 = vpop.trf.xlu0
        %v441 = vpop.trf.xlu0
        %v442 = vpop.trf.xlu0
        %v443 = vpop.trf.xlu0
        %v444 = vpop.trf.xlu0
        %v445 = vpop.trf.xlu0
        %v446 = vpop.trf.xlu0
        %v447 = vpop.trf.xlu0
        %v448 = vpop.trf.xlu0
        %v449 = vpop.trf.xlu0
        %v450 = vpop.trf.xlu0
        %v451 = vpop.trf.xlu0
        %v452 = vpop.trf.xlu0
        %453 = vxpose.xlu0.b32.start [1/16] %v418, 128
        %454 = vxpose.xlu0.b32.cont [2/16] 0.0, 128
        %455 = vxpose.xlu0.b32.cont [3/16] 0.0, 128
        %456 = vxpose.xlu0.b32.cont [4/16] 0.0, 128
        %457 = vxpose.xlu0.b32.cont [5/16] 0.0, 128
        %458 = vxpose.xlu0.b32.cont [6/16] 0.0, 128
        %459 = vxpose.xlu0.b32.cont [7/16] 0.0, 128
        %460 = vxpose.xlu0.b32.cont [8/16] 0.0, 128
        %461 = vxpose.xlu0.b32.cont [9/16] 0.0, 128
        %462 = vxpose.xlu0.b32.cont [10/16] 0.0, 128
        %463 = vxpose.xlu0.b32.cont [11/16] 0.0, 128
        %464 = vxpose.xlu0.b32.cont [12/16] 0.0, 128
        %465 = vxpose.xlu0.b32.cont [13/16] 0.0, 128
        %466 = vxpose.xlu0.b32.cont [14/16] 0.0, 128
        %467 = vxpose.xlu0.b32.cont [15/16] 0.0, 128
        %468 = vxpose.xlu0.b32.end [16/16] 0.0, 128
        %v469 = vpop.trf.xlu0
        %v470 = vpop.trf.xlu0
        %v471 = vpop.trf.xlu0
        %v472 = vpop.trf.xlu0
        %v473 = vpop.trf.xlu0
        %v474 = vpop.trf.xlu0
        %v475 = vpop.trf.xlu0
        %v476 = vpop.trf.xlu0
        %v477 = vpop.trf.xlu0
        %v478 = vpop.trf.xlu0
        %v479 = vpop.trf.xlu0
        %v480 = vpop.trf.xlu0
        %v481 = vpop.trf.xlu0
        %v482 = vpop.trf.xlu0
        %v483 = vpop.trf.xlu0
        %v484 = vpop.trf.xlu0
        %485 = vxpose.xlu0.b32.start [1/16] %v419, 128
        %486 = vxpose.xlu0.b32.cont [2/16] 0.0, 128
        %487 = vxpose.xlu0.b32.cont [3/16] 0.0, 128
        %488 = vxpose.xlu0.b32.cont [4/16] 0.0, 128
        %489 = vxpose.xlu0.b32.cont [5/16] 0.0, 128
        %490 = vxpose.xlu0.b32.cont [6/16] 0.0, 128
        %491 = vxpose.xlu0.b32.cont [7/16] 0.0, 128
        %492 = vxpose.xlu0.b32.cont [8/16] 0.0, 128
        %493 = vxpose.xlu0.b32.cont [9/16] 0.0, 128
        %494 = vxpose.xlu0.b32.cont [10/16] 0.0, 128
        %495 = vxpose.xlu0.b32.cont [11/16] 0.0, 128
        %496 = vxpose.xlu0.b32.cont [12/16] 0.0, 128
        %497 = vxpose.xlu0.b32.cont [13/16] 0.0, 128
        %498 = vxpose.xlu0.b32.cont [14/16] 0.0, 128
        %499 = vxpose.xlu0.b32.cont [15/16] 0.0, 128
        %500 = vxpose.xlu0.b32.end [16/16] 0.0, 128
        %v501 = vpop.trf.xlu0
        %v502 = vpop.trf.xlu0
        %v503 = vpop.trf.xlu0
        %v504 = vpop.trf.xlu0
        %v505 = vpop.trf.xlu0
        %v506 = vpop.trf.xlu0
        %v507 = vpop.trf.xlu0
        %v508 = vpop.trf.xlu0
        %v509 = vpop.trf.xlu0
        %v510 = vpop.trf.xlu0
        %v511 = vpop.trf.xlu0
        %v512 = vpop.trf.xlu0
        %v513 = vpop.trf.xlu0
        %v514 = vpop.trf.xlu0
        %v515 = vpop.trf.xlu0
        %v516 = vpop.trf.xlu0
        %517 = vxpose.xlu0.b32.start [1/16] %v420, 128
        %518 = vxpose.xlu0.b32.cont [2/16] 0.0, 128
        %519 = vxpose.xlu0.b32.cont [3/16] 0.0, 128
        %520 = vxpose.xlu0.b32.cont [4/16] 0.0, 128
        %521 = vxpose.xlu0.b32.cont [5/16] 0.0, 128
        %522 = vxpose.xlu0.b32.cont [6/16] 0.0, 128
        %523 = vxpose.xlu0.b32.cont [7/16] 0.0, 128
        %524 = vxpose.xlu0.b32.cont [8/16] 0.0, 128
        %525 = vxpose.xlu0.b32.cont [9/16] 0.0, 128
        %526 = vxpose.xlu0.b32.cont [10/16] 0.0, 128
        %527 = vxpose.xlu0.b32.cont [11/16] 0.0, 128
        %528 = vxpose.xlu0.b32.cont [12/16] 0.0, 128
        %529 = vxpose.xlu0.b32.cont [13/16] 0.0, 128
        %530 = vxpose.xlu0.b32.cont [14/16] 0.0, 128
        %531 = vxpose.xlu0.b32.cont [15/16] 0.0, 128
        %532 = vxpose.xlu0.b32.end [16/16] 0.0, 128
        %v533 = vpop.trf.xlu0
        %v534 = vpop.trf.xlu0
        %v535 = vpop.trf.xlu0
        %v536 = vpop.trf.xlu0
        %v537 = vpop.trf.xlu0
        %v538 = vpop.trf.xlu0
        %v539 = vpop.trf.xlu0
        %v540 = vpop.trf.xlu0
        %v541 = vpop.trf.xlu0
        %v542 = vpop.trf.xlu0
        %v543 = vpop.trf.xlu0
        %v544 = vpop.trf.xlu0
        %v545 = vpop.trf.xlu0
        %v546 = vpop.trf.xlu0
        %v547 = vpop.trf.xlu0
        %v548 = vpop.trf.xlu0
        %549 = vst.msk [vmem:[%s168] sm:$0xff] %vm240, %v437
        %550 = vst.msk [vmem:[%s168 + $0x8] sm:$0xff] %vm240, %v469
        %551 = vst.msk [vmem:[%s168 + $0x10] sm:$0xff] %vm240, %v501
        %552 = vst.msk [vmem:[%s168 + $0x18] sm:$0xff] %vm240, %v533
        %v553 = vlog2.pop %v437
        %v554 = vmul.f32 %v553, 0.6931472
        %v555 = vlog2.pop %v469
        %v556 = vmul.f32 %v555, 0.6931472
        %v557 = vlog2.pop %v501
        %v558 = vmul.f32 %v557, 0.6931472
        %v559 = vlog2.pop %v533
        %v560 = vmul.f32 %v559, 0.6931472
        %v561 = vmul.f32 %v554, 1.442695
        %v562 = vmul.f32 %v556, 1.442695
        %v563 = vmul.f32 %v558, 1.442695
        %v564 = vmul.f32 %v560, 1.442695
        %565 = vst.msk [vmem:[%s175] sm:$0xff] %vm240, %v561
        %566 = vst.msk [vmem:[%s175 + $0x8] sm:$0xff] %vm240, %v562
        %567 = vst.msk [vmem:[%s175 + $0x10] sm:$0xff] %vm240, %v563
        %568 = vst.msk [vmem:[%s175 + $0x18] sm:$0xff] %vm240, %v564
        %s569 = sand.u32 %s57, 1
        %s570 = scalar_lea.sflag [#allocation6], %s569
        %s571 = sand.u32 %s57, 1
        %s572 = smul.addr %s571, 32
        %s573 = scalar_lea.vmem [#allocation7], %s572
        %s574 = sand.u32 %s83, 1
        %s575 = scalar_lea.sflag [#allocation9], %s574
        %s576 = sand.u32 %s83, 1
        %s577 = smul.addr %s576, 32
        %s578 = scalar_lea.vmem [#allocation8], %s577
        // Predicated region
        $region29: #{tpu_custom_call.1} parent=23 // pred_check
          %p579 = pneg %p67
        $region30: #{tpu_custom_call.1} parent=23 // pred_check_branch
          %581 = sbr.rel (%p579) target = $region32
        $region31: #{tpu_custom_call.1} parent=23 // pred_region
          %s582 = smul.u32 4, %s23
          %584 = vsyncadd %s570, 0
          %s585 = smul.addr %s582, 8
          %s586 = scalar_lea.hbm %s1, %s585
          %s587 = sshll.u32 %s573, 4
          %s588 = int_to_ptr.vmem [resolvable:$true] %s587
          %s589 = sshll.u32 %s586, 4
          %s590 = int_to_ptr.hbm [resolvable:$true] %s589
          %595 = dma.vmem_to_hbm [thread:$0]  %s588, 512, %s590, %s570, 128, 128, 8
        $region32: #{tpu_custom_call.1} parent=23 // pred_fallthru
          _
        // Predicated region
        $region33: #{tpu_custom_call.1} parent=23 // pred_check
          %p596 = pneg %p93
        $region34: #{tpu_custom_call.1} parent=23 // pred_check_branch
          %598 = sbr.rel (%p596) target = $region36
        $region35: #{tpu_custom_call.1} parent=23 // pred_region
          %s599 = smul.u32 4, %s23
          %601 = vsyncadd %s575, 0
          %s602 = smul.addr %s599, 8
          %s603 = scalar_lea.hbm %s2, %s602
          %s604 = sshll.u32 %s578, 4
          %s605 = int_to_ptr.vmem [resolvable:$true] %s604
          %s606 = sshll.u32 %s603, 4
          %s607 = int_to_ptr.hbm [resolvable:$true] %s606
          %612 = dma.vmem_to_hbm [thread:$0]  %s605, 512, %s607, %s575, 128, 128, 8
        $region36: #{tpu_custom_call.1} parent=23 // pred_fallthru
          _
      $region24: #{tpu_custom_call.1} parent=5 // pred_fallthru
        _
      %p613 = scmp.le.s32.totalorder 2, %s18
      // Predicated region
      $region37: #{tpu_custom_call.1} parent=5 // pred_check
        %p614 = pneg %p613
      $region38: #{tpu_custom_call.1} parent=5 // pred_check_branch
        %616 = sbr.rel (%p614) target = $region40
      $region39: #{tpu_custom_call.1} parent=5 // pred_region
        %s617 = ssub.s32 %s18, 2
        // Predicated region
        $region41: #{tpu_custom_call.1} parent=39 // pred_check
          %p618 = pneg %p73
        $region42: #{tpu_custom_call.1} parent=39 // pred_check_branch
          %620 = sbr.rel (%p618) target = $region44
        $region43: #{tpu_custom_call.1} parent=39 // pred_region
          %s621 = sand.u32 %s58, 1
          %s622 = scalar_lea.sflag [#allocation6], %s621
          %s623 = sand.u32 %s58, 1
          %s624 = smul.addr %s623, 32
          %s625 = scalar_lea.vmem [#allocation7], %s624
          %627 = dma.done %s622, 512
        $region44: #{tpu_custom_call.1} parent=39 // pred_fallthru
          _
        // Predicated region
        $region45: #{tpu_custom_call.1} parent=39 // pred_check
          %p628 = pneg %p99
        $region46: #{tpu_custom_call.1} parent=39 // pred_check_branch
          %630 = sbr.rel (%p628) target = $region48
        $region47: #{tpu_custom_call.1} parent=39 // pred_region
          %s631 = sand.u32 %s84, 1
          %s632 = scalar_lea.sflag [#allocation9], %s631
          %s633 = sand.u32 %s84, 1
          %s634 = smul.addr %s633, 32
          %s635 = scalar_lea.vmem [#allocation8], %s634
          %637 = dma.done %s632, 512
        $region48: #{tpu_custom_call.1} parent=39 // pred_fallthru
          _
      $region40: #{tpu_custom_call.1} parent=5 // pred_fallthru
        _
    $region6: #{tpu_custom_call.1} parent=1 // loop_footer
      %s22 = sadd.s32 1, %s18
    $region7: #{tpu_custom_call.1} parent=1 // loop_footer_branch
      %17 = sbr.rel target = $region3
    $region8: #{tpu_custom_call.1} parent=1 // loop_exit
      _
    %638 = vsyncpa [#allocation5], 1
    %s639 = scalar_lea.sflag [#allocation5], 1
    %640 = vsyncpa %s639, 1
    %641 = vsyncpa [#allocation6], 1
    %s642 = scalar_lea.sflag [#allocation6], 1
    %643 = vsyncpa %s642, 1
    %644 = vsyncpa [#allocation9], 1
    %s645 = scalar_lea.sflag [#allocation9], 1
    %646 = vsyncpa %s645, 1

</llo_original>
